<compile_context>
chip_gen: v6e
topology: v6e:2x2x1
jax: 0.10.0
libtpu: 0.0.40
codegen_flags: <defaults>
</compile_context>

<pallas_src>
import functools

import jax
import jax.numpy as jnp
from jax.experimental import pallas as pl
from jax.experimental.pallas import tpu as pltpu


def _dim_reduction_kernel(x_ref, w_ref, b_ref, o_ref, *, negative_slope):
    # x_ref : (1, Cin,  T)   input pixels, H*W flattened on the lane axis
    # w_ref : (Cout, Cin)    1x1-conv weight with eval-BN scale folded in
    # b_ref : (Cout, 1)      eval-BN shift folded into a per-channel bias (f32)
    # o_ref : (1, Cout, T)
    x = x_ref[0]                                                      # (Cin, T)
    y = jnp.dot(w_ref[...], x, preferred_element_type=jnp.float32)    # MXU, f32 acc
    y = y + b_ref[...]                                                # lane broadcast
    # LeakyReLU with 0 < slope < 1:  max(y, slope*y)  (mul + max on the VPU)
    y = jnp.maximum(y, negative_slope * y)
    o_ref[0] = y.astype(o_ref.dtype)


def _vmem_tile_budget_bytes() -> int:
    """VMEM budget for the double-buffered input/output tiles of one grid step."""
    try:
        cap = int(getattr(pltpu.get_tpu_info(), "vmem_capacity_bytes", 64 << 20))
    except Exception:
        cap = 64 << 20  # conservative: v7x physical VMEM per TensorCore
    # Stay well inside every generation's scoped default (16 MiB v5e,
    # 32 MiB v6e/v7x) and leave headroom for weights + compiler scratch.
    return int(min(cap // 4, 12 << 20))


def _pick_hw_tile(hw, cin, cout, in_bytes, out_bytes, *, max_tile=4096) -> int:
    """Lane tile along flattened H*W: multiple of 128, sized by VMEM budget."""
    budget = _vmem_tile_budget_bytes()
    per_col = 2 * (cin * in_bytes + cout * out_bytes)   # double-buffered in+out
    t = (budget // per_col) // 128 * 128
    t = int(max(128, min(t, max_tile)))
    hw128 = pl.cdiv(hw, 128) * 128
    return int(min(t, hw128))


def dim_reduction(x_nchw, conv_weight_oihw, bn_gamma, bn_beta, bn_mean, bn_var,
                  *, eps=1e-5, negative_slope=0.01,
                  compute_dtype=None, out_dtype=None):
    """Conv2d(1x1, bias=False) + BatchNorm2d(eval) + LeakyReLU, fused.

    x: (B, Cin, H, W) -> (B, Cout, H, W).
    compute_dtype: matmul operand dtype (bf16 recommended at production scale).
    out_dtype: output activation dtype. Both default to x.dtype.
    """
    B, Cin, H, W = x_nchw.shape
    Cout = conv_weight_oihw.shape[0]
    HW = H * W
    compute_dtype = compute_dtype or x_nchw.dtype
    out_dtype = out_dtype or x_nchw.dtype
    in_bytes = jnp.dtype(compute_dtype).itemsize
    out_bytes = jnp.dtype(out_dtype).itemsize

    # Fold 1x1 conv (no bias) + eval-mode BN into one affine (fold in f32, then cast):
    #   y = scale * (W @ x - mean) + beta = W_fused @ x + b_fused
    scale = (bn_gamma.astype(jnp.float32)
             / jnp.sqrt(bn_var.astype(jnp.float32) + eps))             # (Cout,)
    w2d = conv_weight_oihw.reshape(Cout, Cin).astype(jnp.float32)
    w_fused = (w2d * scale[:, None]).astype(compute_dtype)             # (Cout, Cin)
    b_fused = (bn_beta.astype(jnp.float32)
               - bn_mean.astype(jnp.float32) * scale).reshape(Cout, 1)  # f32

    # Free reshape (no transpose): H*W on the 128-lane axis.
    x_flat = x_nchw.reshape(B, Cin, HW).astype(compute_dtype)

    T = _pick_hw_tile(HW, Cin, Cout, in_bytes, out_bytes)
    HW_pad = pl.cdiv(HW, T) * T
    if HW_pad != HW:
        x_flat = jnp.pad(x_flat, ((0, 0), (0, 0), (0, HW_pad - HW)))
    grid = (B, HW_pad // T)

    # Double-buffered in/out tiles + single-buffered resident weights/bias.
    vmem_used = (2 * Cin * T * in_bytes + 2 * Cout * T * out_bytes
                 + Cout * Cin * in_bytes + Cout * 4)
    vmem_limit = int(min(56 << 20, max(32 << 20, 2 * vmem_used)))

    kernel = functools.partial(_dim_reduction_kernel,
                               negative_slope=negative_slope)

    def _call(in_specs):
        return pl.pallas_call(
            kernel,
            out_shape=jax.ShapeDtypeStruct((B, Cout, HW_pad), out_dtype),
            grid_spec=pltpu.PrefetchScalarGridSpec(
                num_scalar_prefetch=0,
                grid=grid,
                in_specs=in_specs,
                out_specs=pl.BlockSpec((1, Cout, T), lambda b, t: (b, 0, t)),
            ),
            compiler_params=pltpu.CompilerParams(
                dimension_semantics=("parallel", "parallel"),
                vmem_limit_bytes=vmem_limit),
        )(x_flat, w_fused, b_fused)

    x_spec = pl.BlockSpec((1, Cin, T), lambda b, t: (b, 0, t))
    try:
        # Constant index_maps: weights/bias stay VMEM-resident across grid
        # steps; a second pipeline buffer would be dead, so request just one.
        w_spec = pl.BlockSpec((Cout, Cin), lambda b, t: (0, 0),
                              pipeline_mode=pl.Buffered(1))
        b_spec = pl.BlockSpec((Cout, 1), lambda b, t: (0, 0),
                              pipeline_mode=pl.Buffered(1))
        out_flat = _call([x_spec, w_spec, b_spec])
    except Exception:
        # Fallback if this jax version rejects pipeline_mode on pallas_call specs.
        w_spec = pl.BlockSpec((Cout, Cin), lambda b, t: (0, 0))
        b_spec = pl.BlockSpec((Cout, 1), lambda b, t: (0, 0))
        out_flat = _call([x_spec, w_spec, b_spec])

    out = out_flat[:, :, :HW] if HW_pad != HW else out_flat
    return out.reshape(B, Cout, H, W)


def _reference(x, conv_weight_oihw, bn_gamma, bn_beta, bn_mean, bn_var,
               eps=1e-5, negative_slope=0.01):
    # Pure-JAX reference (unfused conv -> BN(eval) -> LeakyReLU).
    y = jax.lax.conv_general_dilated(
        x, conv_weight_oihw, window_strides=(1, 1), padding='VALID',
        dimension_numbers=('NCHW', 'OIHW', 'NCHW'))
    y = (y - bn_mean[None, :, None, None]) / jnp.sqrt(bn_var[None, :, None, None] + eps)
    y = y * bn_gamma[None, :, None, None] + bn_beta[None, :, None, None]
    return jnp.where(y >= 0, y, negative_slope * y)


if __name__ == "__main__":
    B, Cin, Cout, H, W = 2, 8, 4, 16, 16

    key = jax.random.PRNGKey(0)
    k1, k2, k3, k4, k5, k6, k7 = jax.random.split(key, 7)
    x = jax.random.normal(k1, (B, Cin, H, W), dtype=jnp.float32)
    conv_w = jax.random.normal(k2, (Cout, Cin, 1, 1), dtype=jnp.float32) * 0.1
    gamma = 1.0 + 0.1 * jax.random.normal(k3, (Cout,), dtype=jnp.float32)
    beta = 0.1 * jax.random.normal(k4, (Cout,), dtype=jnp.float32)
    running_mean = 0.1 * jax.random.normal(k5, (Cout,), dtype=jnp.float32)
    running_var = jax.random.uniform(k6, (Cout,), dtype=jnp.float32,
                                     minval=0.5, maxval=1.5)

    # f32 path: exact parity with the PyTorch eval-mode module.
    out = dim_reduction(x, conv_w, gamma, beta, running_mean, running_var)
    jax.block_until_ready(out)
    ref = _reference(x, conv_w, gamma, beta, running_mean, running_var)
    assert out.shape == (B, Cout, H, W)
    max_err = float(jnp.max(jnp.abs(out - ref)))
    assert jnp.allclose(out, ref, atol=1e-4, rtol=1e-4), f"max err {max_err}"

    # bf16-matmul path on a non-128-divisible spatial size (exercises padding).
    H2 = W2 = 15
    x2 = jax.random.normal(k7, (B, Cin, H2, W2), dtype=jnp.float32)
    out2 = dim_reduction(x2, conv_w, gamma, beta, running_mean, running_var,
                         compute_dtype=jnp.bfloat16)
    jax.block_until_ready(out2)
    ref2 = _reference(x2, conv_w, gamma, beta, running_mean, running_var)
    assert out2.shape == (B, Cout, H2, W2)
    max_err2 = float(jnp.max(jnp.abs(out2.astype(jnp.float32) - ref2)))
    assert jnp.allclose(out2.astype(jnp.float32), ref2, atol=5e-2, rtol=5e-2), \
        f"bf16 max err {max_err2}"

    print("KERNEL_OK")
</pallas_src>

<mosaic_0001>
module attributes {stable_mosaic.version = 11 : i64} {
  func.func @_dim_reduction_kernel(%arg0: i32, %arg1: i32, %arg2: memref<1x8x256xf32, #tpu.memory_space<vmem>>, %arg3: memref<4x8xf32, #tpu.memory_space<vmem>>, %arg4: memref<4x1xf32, #tpu.memory_space<vmem>>, %arg5: memref<1x4x256xf32, #tpu.memory_space<vmem>>) attributes {dimension_semantics = [#tpu.dimension_semantics<parallel>, #tpu.dimension_semantics<parallel>], iteration_bounds = array<i64: 2, 1>, scalar_prefetch = 0 : i64, scratch_operands = 0 : i64, tpu.core_type = #tpu.core_type<tc>, window_params = [{transform_indices = @transform_0, window_bounds = array<i64: 1, 8, 256>}, {pipeline_mode = #tpu.pipeline_mode<synchronous>, transform_indices = @transform_1, window_bounds = array<i64: 4, 8>}, {pipeline_mode = #tpu.pipeline_mode<synchronous>, transform_indices = @transform_2, window_bounds = array<i64: 4, 1>}, {transform_indices = @transform_3, window_bounds = array<i64: 1, 4, 256>}]} {
    %c0 = arith.constant 0 : index
    %c0_0 = arith.constant 0 : index
    %c0_1 = arith.constant 0 : index
    %0 = vector.load %arg2[%c0, %c0_0, %c0_1] : memref<1x8x256xf32, #tpu.memory_space<vmem>>, vector<1x8x256xf32>
    %1 = vector.shape_cast %0 : vector<1x8x256xf32> to vector<8x256xf32>
    %c0_2 = arith.constant 0 : index
    %c0_3 = arith.constant 0 : index
    %2 = vector.load %arg3[%c0_2, %c0_3] : memref<4x8xf32, #tpu.memory_space<vmem>>, vector<4x8xf32>
    %cst = arith.constant dense<0.000000e+00> : vector<4x256xf32>
    %3 = tpu.matmul %2, %1, %cst {dimension_numbers = #tpu.dot_dimension_numbers<[1], [0], [0], [1], [0, 0, 1, 1], [], []>} : vector<4x8xf32>, vector<8x256xf32>, vector<4x256xf32> -> vector<4x256xf32>
    %c0_4 = arith.constant 0 : index
    %c0_5 = arith.constant 0 : index
    %4 = vector.load %arg4[%c0_4, %c0_5] : memref<4x1xf32, #tpu.memory_space<vmem>>, vector<4x1xf32>
    %5 = vector.broadcast %4 : vector<4x1xf32> to vector<4x256xf32>
    %6 = arith.addf %3, %5 : vector<4x256xf32>
    %cst_6 = arith.constant 0.00999999977 : f32
    %7 = vector.broadcast %cst_6 : f32 to vector<4x256xf32>
    %8 = arith.mulf %7, %6 : vector<4x256xf32>
    %9 = arith.maximumf %6, %8 : vector<4x256xf32>
    %c0_7 = arith.constant 0 : index
    %c0_8 = arith.constant 0 : index
    %c0_9 = arith.constant 0 : index
    %10 = vector.load %arg5[%c0_7, %c0_8, %c0_9] : memref<1x4x256xf32, #tpu.memory_space<vmem>>, vector<1x4x256xf32>
    %11 = vector.shape_cast %10 : vector<1x4x256xf32> to vector<4x256xf32>
    %12 = vector.shape_cast %9 : vector<4x256xf32> to vector<1x4x256xf32>
    tpu.vector_store %arg5[%c0_7, %c0_8, %c0_9], %12 {strides = array<i32>} : memref<1x4x256xf32, #tpu.memory_space<vmem>>, vector<1x4x256xf32>,
    return
  }
  func.func @transform_0(%arg0: i32, %arg1: i32) -> (i32, i32, i32) {
    %c0_i32 = arith.constant 0 : i32
    %c0_i32_0 = arith.constant 0 : i32
    return %arg0, %c0_i32, %arg1 : i32, i32, i32
  }
  func.func @transform_1(%arg0: i32, %arg1: i32) -> (i32, i32) {
    %c0_i32 = arith.constant 0 : i32
    %c0_i32_0 = arith.constant 0 : i32
    %c0_i32_1 = arith.constant 0 : i32
    return %c0_i32, %c0_i32_0 : i32, i32
  }
  func.func @transform_2(%arg0: i32, %arg1: i32) -> (i32, i32) {
    %c0_i32 = arith.constant 0 : i32
    %c0_i32_0 = arith.constant 0 : i32
    %c0_i32_1 = arith.constant 0 : i32
    return %c0_i32, %c0_i32_0 : i32, i32
  }
  func.func @transform_3(%arg0: i32, %arg1: i32) -> (i32, i32, i32) {
    %c0_i32 = arith.constant 0 : i32
    %c0_i32_0 = arith.constant 0 : i32
    return %arg0, %c0_i32, %arg1 : i32, i32, i32
  }
}

module attributes {stable_mosaic.version = 11 : i64} {
  func.func @_dim_reduction_kernel(%arg0: i32, %arg1: i32, %arg2: memref<1x8x256xf32, #tpu.memory_space<vmem>>, %arg3: memref<4x8xf32, #tpu.memory_space<vmem>>, %arg4: memref<4x1xf32, #tpu.memory_space<vmem>>, %arg5: memref<1x4x256xf32, #tpu.memory_space<vmem>>) attributes {dimension_semantics = [#tpu.dimension_semantics<parallel>, #tpu.dimension_semantics<parallel>], iteration_bounds = array<i64: 2, 1>, scalar_prefetch = 0 : i64, scratch_operands = 0 : i64, tpu.core_type = #tpu.core_type<tc>, window_params = [{transform_indices = @transform_0, window_bounds = array<i64: 1, 8, 256>}, {pipeline_mode = #tpu.pipeline_mode<synchronous>, transform_indices = @transform_1, window_bounds = array<i64: 4, 8>}, {pipeline_mode = #tpu.pipeline_mode<synchronous>, transform_indices = @transform_2, window_bounds = array<i64: 4, 1>}, {transform_indices = @transform_3, window_bounds = array<i64: 1, 4, 256>}]} {
    %c0 = arith.constant 0 : index
    %c0_0 = arith.constant 0 : index
    %c0_1 = arith.constant 0 : index
    %0 = vector.load %arg2[%c0, %c0_0, %c0_1] : memref<1x8x256xf32, #tpu.memory_space<vmem>>, vector<1x8x256xf32>
    %1 = vector.shape_cast %0 : vector<1x8x256xf32> to vector<8x256xf32>
    %c0_2 = arith.constant 0 : index
    %c0_3 = arith.constant 0 : index
    %2 = vector.load %arg3[%c0_2, %c0_3] : memref<4x8xf32, #tpu.memory_space<vmem>>, vector<4x8xf32>
    %cst = arith.constant dense<0.000000e+00> : vector<4x256xf32>
    %3 = tpu.matmul %2, %1, %cst {dimension_numbers = #tpu.dot_dimension_numbers<[1], [0], [0], [1], [0, 0, 1, 1], [], []>} : vector<4x8xf32>, vector<8x256xf32>, vector<4x256xf32> -> vector<4x256xf32>
    %c0_4 = arith.constant 0 : index
    %c0_5 = arith.constant 0 : index
    %4 = vector.load %arg4[%c0_4, %c0_5] : memref<4x1xf32, #tpu.memory_space<vmem>>, vector<4x1xf32>
    %5 = vector.broadcast %4 : vector<4x1xf32> to vector<4x256xf32>
    %6 = arith.addf %3, %5 : vector<4x256xf32>
    %cst_6 = arith.constant 0.00999999977 : f32
    %7 = vector.broadcast %cst_6 : f32 to vector<4x256xf32>
    %8 = arith.mulf %7, %6 : vector<4x256xf32>
    %9 = arith.maximumf %6, %8 : vector<4x256xf32>
    %c0_7 = arith.constant 0 : index
    %c0_8 = arith.constant 0 : index
    %c0_9 = arith.constant 0 : index
    %10 = vector.load %arg5[%c0_7, %c0_8, %c0_9] : memref<1x4x256xf32, #tpu.memory_space<vmem>>, vector<1x4x256xf32>
    %11 = vector.shape_cast %10 : vector<1x4x256xf32> to vector<4x256xf32>
    %12 = vector.shape_cast %9 : vector<4x256xf32> to vector<1x4x256xf32>
    tpu.vector_store %arg5[%c0_7, %c0_8, %c0_9], %12 {strides = array<i32>} : memref<1x4x256xf32, #tpu.memory_space<vmem>>, vector<1x4x256xf32>,
    return
  }
  func.func @transform_0(%arg0: i32, %arg1: i32) -> (i32, i32, i32) {
    %c0_i32 = arith.constant 0 : i32
    %c0_i32_0 = arith.constant 0 : i32
    return %arg0, %c0_i32, %arg1 : i32, i32, i32
  }
  func.func @transform_1(%arg0: i32, %arg1: i32) -> (i32, i32) {
    %c0_i32 = arith.constant 0 : i32
    %c0_i32_0 = arith.constant 0 : i32
    %c0_i32_1 = arith.constant 0 : i32
    return %c0_i32, %c0_i32_0 : i32, i32
  }
  func.func @transform_2(%arg0: i32, %arg1: i32) -> (i32, i32) {
    %c0_i32 = arith.constant 0 : i32
    %c0_i32_0 = arith.constant 0 : i32
    %c0_i32_1 = arith.constant 0 : i32
    return %c0_i32, %c0_i32_0 : i32, i32
  }
  func.func @transform_3(%arg0: i32, %arg1: i32) -> (i32, i32, i32) {
    %c0_i32 = arith.constant 0 : i32
    %c0_i32_0 = arith.constant 0 : i32
    return %arg0, %c0_i32, %arg1 : i32, i32, i32
  }
}

</mosaic_0001>

<llo_original>
// kernel: tpu_custom_call.1
$region0: #{tpu_custom_call.1}
  #allocation0 [shape = 'u32[]', space=smem, size = 0x4, offset = 0x4, fixed_abs, tag = 'smem constant byte address 0x4 - core index']
  #allocation1 [shape = 'u32[144,128]{1,0:T(1,128)}', space=vmem, size = 0x12000, scoped, tag = 'internal scratch']
  %s0 = inlined_call_operand.hbm [shape: f32[2,8,256], index: 0, kind: input, shape index: {}]
  %s1 = inlined_call_operand.vmem [shape: f32[4,8], index: 1, kind: input, shape index: {}]
  %s2 = inlined_call_operand.vmem [shape: f32[4,1], index: 2, kind: input, shape index: {}]
  %s3 = inlined_call_operand.hbm [shape: f32[2,4,256], index: 3, kind: output, shape index: {}]
  %s4 = sld [smem:[#allocation0]]
  $region49: #{tpu_custom_call.1} parent=0
    _
  %s6 = ssub.s32 1, %s4
  %s7 = scalar_select 0, %s6, %s4
  $region1: #{tpu_custom_call.1} parent=0
    #allocation2 [shape = 'u8[16384]{0}', space=vmem, size = 0x4000, scoped, tag = 'input window, operand 0']
    #allocation3 [shape = 's32[2]{0}', space=sflag, size = 0x8, scoped, tag = 'scoped memory for tpu_custom_call.1']
    #allocation4 [shape = 's32[2]{0}', space=sflag, size = 0x8, scoped, tag = 'scoped memory for tpu_custom_call.1']
    #allocation5 [shape = 'u8[8192]{0}', space=vmem, size = 0x2000, scoped, tag = 'output window, operand 0']
    %8 = vsyncpa [#allocation3], 0
    %s9 = scalar_lea.sflag [#allocation3], 1
    %10 = vsyncpa %s9, 0
    %11 = vsyncpa [#allocation4], 0
    %s12 = scalar_lea.sflag [#allocation4], 1
    %13 = vsyncpa %s12, 0
    loop: start=0, step=1, limit=4
    $region2: #{tpu_custom_call.1} parent=1 // loop_pre_header
      _
    $region3: #{tpu_custom_call.1} parent=1 // loop_header
      %s15 = sphi 0, %s19
      %p16 = scmp.ge.s32.totalorder %s15, 4
      %s22 = sphi 0, %s34
      %s23 = sphi 0, %s30
      %s24 = sphi 0, %s22
      %s25 = sphi 0, %s23
      %s26 = sphi 0, %s24
      %s27 = sphi 0, %s25
      %s39 = sphi 0, %s41
      %s42 = sphi 0, %s39
      %s43 = sphi 0, %s42
      %s59 = sphi 0, %s43
      %s63 = sphi 0, %s63
      %s65 = sphi 0, %s63
      %s66 = sphi 0, %s65
      %s80 = sphi 0, %s66
      %s84 = sphi 0, %s84
      %s86 = sphi 0, %s84
      %s87 = sphi 0, %s86
      %s101 = sphi 0, %s87
      %s109 = sphi 0, %s111
      %s112 = sphi 0, %s109
      %s113 = sphi 0, %s112
      %s129 = sphi 0, %s113
    $region4: #{tpu_custom_call.1} parent=1 // loop_header_branch
      %18 = sbr.rel (%p16) target = $region8
    $region5: #{tpu_custom_call.1} parent=1 // loop_body
      %s20 = ssub.s32 %s15, 1
      %s21 = ssub.s32 %s15, 2
      %s28 = sadd.s32 1, %s23
      %p29 = scmp.ge.s32.totalorder %s28, 1
      %s30 = scalar_select %p29, 0, %s28
      %s31 = sadd.s32 1, %s22
      %s32 = scalar_select %p29, %s31, %s22
      %p33 = scmp.ge.s32.totalorder %s32, 2
      %s34 = scalar_select %p33, 0, %s32
      %s35 = ssub.s32 %s22, %s34
      %s36 = ssub.s32 %s23, %s30
      %s37 = sor.u32 %s35, %s36
      %p38 = scmp.eq.s32.totalorder %s37, 0
      %s40 = sadd.s32 %s39, 1
      %s41 = scalar_select %p38, %s39, %s40
      %p44 = pneg %p38
      %p45 = scmp.eq.s32.totalorder %s15, 1
      %p46 = por %p44, %p45
      %p47 = scmp.ne.s32.totalorder %s39, %s42
      %p48 = scmp.eq.s32.totalorder %s15, 0
      %p49 = por %p47, %p48
      %p50 = scmp.ne.s32.totalorder %s39, %s42
      %p51 = scmp.eq.s32.totalorder %s20, 1
      %p52 = por %p50, %p51
      %p53 = scmp.ne.s32.totalorder %s42, %s43
      %p54 = scmp.eq.s32.totalorder %s20, 0
      %p55 = por %p53, %p54
      %p56 = scmp.ne.s32.totalorder %s42, %s43
      %p57 = scmp.eq.s32.totalorder %s21, 1
      %p58 = por %p56, %p57
      %p60 = scmp.ne.s32.totalorder %s43, %s59
      %p61 = scmp.eq.s32.totalorder %s21, 0
      %p62 = por %p60, %p61
      %s64 = sadd.s32 %s63, 1
      %p67 = scmp.eq.s32.totalorder %s15, 1
      %p68 = scmp.ne.s32.totalorder %s63, %s65
      %p69 = scmp.eq.s32.totalorder %s15, 0
      %p70 = por %p68, %p69
      %p71 = scmp.ne.s32.totalorder %s63, %s65
      %p72 = scmp.eq.s32.totalorder %s20, 1
      %p73 = por %p71, %p72
      %p74 = scmp.ne.s32.totalorder %s65, %s66
      %p75 = scmp.eq.s32.totalorder %s20, 0
      %p76 = por %p74, %p75
      %p77 = scmp.ne.s32.totalorder %s65, %s66
      %p78 = scmp.eq.s32.totalorder %s21, 1
      %p79 = por %p77, %p78
      %p81 = scmp.ne.s32.totalorder %s66, %s80
      %p82 = scmp.eq.s32.totalorder %s21, 0
      %p83 = por %p81, %p82
      %s85 = sadd.s32 %s84, 1
      %p88 = scmp.eq.s32.totalorder %s15, 1
      %p89 = scmp.ne.s32.totalorder %s84, %s86
      %p90 = scmp.eq.s32.totalorder %s15, 0
      %p91 = por %p89, %p90
      %p92 = scmp.ne.s32.totalorder %s84, %s86
      %p93 = scmp.eq.s32.totalorder %s20, 1
      %p94 = por %p92, %p93
      %p95 = scmp.ne.s32.totalorder %s86, %s87
      %p96 = scmp.eq.s32.totalorder %s20, 0
      %p97 = por %p95, %p96
      %p98 = scmp.ne.s32.totalorder %s86, %s87
      %p99 = scmp.eq.s32.totalorder %s21, 1
      %p100 = por %p98, %p99
      %p102 = scmp.ne.s32.totalorder %s87, %s101
      %p103 = scmp.eq.s32.totalorder %s21, 0
      %p104 = por %p102, %p103
      %s105 = ssub.s32 %s22, %s34
      %s106 = ssub.s32 %s23, %s30
      %s107 = sor.u32 %s105, %s106
      %p108 = scmp.eq.s32.totalorder %s107, 0
      %s110 = sadd.s32 %s109, 1
      %s111 = scalar_select %p108, %s109, %s110
      %p114 = pneg %p108
      %p115 = scmp.eq.s32.totalorder %s15, 1
      %p116 = por %p114, %p115
      %p117 = scmp.ne.s32.totalorder %s109, %s112
      %p118 = scmp.eq.s32.totalorder %s15, 0
      %p119 = por %p117, %p118
      %p120 = scmp.ne.s32.totalorder %s109, %s112
      %p121 = scmp.eq.s32.totalorder %s20, 1
      %p122 = por %p120, %p121
      %p123 = scmp.ne.s32.totalorder %s112, %s113
      %p124 = scmp.eq.s32.totalorder %s20, 0
      %p125 = por %p123, %p124
      %p126 = scmp.ne.s32.totalorder %s112, %s113
      %p127 = scmp.eq.s32.totalorder %s21, 1
      %p128 = por %p126, %p127
      %p130 = scmp.ne.s32.totalorder %s113, %s129
      %p131 = scmp.eq.s32.totalorder %s21, 0
      %p132 = por %p130, %p131
      %p133 = scmp.le.s32.totalorder 1, %s15
      %p134 = scmp.lt.s32.totalorder %s15, 3
      %p135 = pnand %p133, %p134
      %p136 = pneg %p135
      // Predicated region
      $region9: #{tpu_custom_call.1} parent=5 // pred_check
        _
      $region10: #{tpu_custom_call.1} parent=5 // pred_check_branch
        %138 = sbr.rel (%p135) target = $region12
      $region11: #{tpu_custom_call.1} parent=5 // pred_region
        %s139 = ssub.s32 %s15, 1
        // Predicated region
        $region13: #{tpu_custom_call.1} parent=11 // pred_check
          %p140 = pneg %p76
        $region14: #{tpu_custom_call.1} parent=11 // pred_check_branch
          %142 = sbr.rel (%p140) target = $region16
        $region15: #{tpu_custom_call.1} parent=11 // pred_region
          _
        $region16: #{tpu_custom_call.1} parent=11 // pred_fallthru
          _
        // Predicated region
        $region17: #{tpu_custom_call.1} parent=11 // pred_check
          %p143 = pneg %p97
        $region18: #{tpu_custom_call.1} parent=11 // pred_check_branch
          %145 = sbr.rel (%p143) target = $region20
        $region19: #{tpu_custom_call.1} parent=11 // pred_region
          _
        $region20: #{tpu_custom_call.1} parent=11 // pred_fallthru
          _
      $region12: #{tpu_custom_call.1} parent=5 // pred_fallthru
        _
      %p146 = scmp.lt.s32.totalorder %s15, 2
      // Predicated region
      $region21: #{tpu_custom_call.1} parent=5 // pred_check
        %p147 = pneg %p146
      $region22: #{tpu_custom_call.1} parent=5 // pred_check_branch
        %149 = sbr.rel (%p147) target = $region24
      $region23: #{tpu_custom_call.1} parent=5 // pred_region
        // Predicated region
        $region25: #{tpu_custom_call.1} parent=23 // pred_check
          %p150 = pneg %p49
        $region26: #{tpu_custom_call.1} parent=23 // pred_check_branch
          %152 = sbr.rel (%p150) target = $region28
        $region27: #{tpu_custom_call.1} parent=23 // pred_region
          %s153 = sand.u32 %s39, 1
          %s154 = scalar_lea.sflag [#allocation3], %s153
          %s155 = sand.u32 %s39, 1
          %s156 = smul.addr %s155, 16
          %s157 = scalar_lea.vmem [#allocation2], %s156
          %s158 = smul.u32 2, %s23
          %s160 = ssub.s32 256, 256
          %161 = vsyncadd %s154, %s160
          %s162 = smul.addr %s22, 2
          %s163 = sadd.s32 %s158, %s162
          %s164 = smul.addr %s163, 128
          %s165 = scalar_lea.hbm %s0, %s164
          %s167 = sshll.u32 %s157, 4
          %s168 = int_to_ptr.vmem [resolvable:$true] %s167
          %170 = dma.hbm_to_vmem [thread:$0]  %s165, 256, %s168, %s154
        $region28: #{tpu_custom_call.1} parent=23 // pred_fallthru
          _
      $region24: #{tpu_custom_call.1} parent=5 // pred_fallthru
        _
      %p171 = scmp.le.s32.totalorder 1, %s15
      %p172 = scmp.lt.s32.totalorder %s15, 3
      %p173 = pnand %p171, %p172
      %p174 = pneg %p173
      // Predicated region
      $region29: #{tpu_custom_call.1} parent=5 // pred_check
        _
      $region30: #{tpu_custom_call.1} parent=5 // pred_check_branch
        %176 = sbr.rel (%p173) target = $region32
      $region31: #{tpu_custom_call.1} parent=5 // pred_region
        %s177 = ssub.s32 %s15, 1
        %s178 = sand.u32 %s42, 1
        %s179 = scalar_lea.sflag [#allocation3], %s178
        %s180 = sand.u32 %s42, 1
        %s181 = smul.addr %s180, 16
        %s182 = scalar_lea.vmem [#allocation2], %s181
        // Predicated region
        $region33: #{tpu_custom_call.1} parent=31 // pred_check
          %p183 = pneg %p55
        $region34: #{tpu_custom_call.1} parent=31 // pred_check_branch
          %185 = sbr.rel (%p183) target = $region36
        $region35: #{tpu_custom_call.1} parent=31 // pred_region
          %186 = dma.done %s179, 256
        $region36: #{tpu_custom_call.1} parent=31 // pred_fallthru
          _
        %s187 = sand.u32 %s42, 1
        %s188 = scalar_lea.sflag [#allocation3], %s187
        %s189 = sand.u32 %s42, 1
        %s190 = smul.addr %s189, 16
        %s191 = scalar_lea.vmem [#allocation2], %s190
        %p192 = pneg %p55
        %p193 = pneg %p52
        %p194 = pneg %p76
        %p195 = pneg %p73
        %p196 = pneg %p97
        %p197 = pneg %p94
        %p198 = pneg %p125
        %p199 = pneg %p122
        %s200 = sand.u32 %s112, 1
        %s201 = scalar_lea.sflag [#allocation4], %s200
        %s202 = sand.u32 %s112, 1
        %s203 = smul.addr %s202, 8
        %s204 = scalar_lea.vmem [#allocation5], %s203
        %s205 = smul.u32 2, %s25
        %s206 = smul.u32 2, %s25
        %v207 = vld [vmem:[%s182] sm:$0xff]
        %v208 = vld [vmem:[%s182 + $0x8] sm:$0xff]
        %v209 = vld [vmem:[%s1] sm:$0xf]
        %v210 = vld [vmem:[%s2] sm:$0xf]
        %212 = vset.pattern.permute.xlu0 0
        %213 = vperm.xlu0 %212, %v210
        %v214 = vpop.permute.xlu0 %213
        %vm216 = vcmask 64512
        %v218 = vsel %vm216, %v209, 0
        %220 = vmatprep.subr.mxu0 0.0
        %221 = vmatpush1.msra.mxu0 0.0
        %222 = vmatprep.subr.mxu0 0.0
        %223 = vmatpush1.msra.mxu0 0.0
        %224 = vmatprep.subr.mxu0 0.0
        %225 = vmatpush1.msra.mxu0 0.0
        %226 = vmatprep.subr.mxu0 0.0
        %227 = vmatpush1.msra.mxu0 0.0
        %228 = vmatprep.subr.mxu0 0.0
        %229 = vmatpush1.msra.mxu0 0.0
        %230 = vmatprep.subr.mxu0 0.0
        %231 = vmatpush1.msra.mxu0 0.0
        %232 = vmatprep.subr.mxu0 0.0
        %233 = vmatpush1.msra.mxu0 0.0
        %234 = vmatprep.subr.mxu0 0.0
        %235 = vmatpush1.msra.mxu0 0.0
        %236 = vmatprep.subr.mxu0 0.0
        %237 = vmatpush1.msra.mxu0 0.0
        %238 = vmatprep.subr.mxu0 0.0
        %239 = vmatpush1.msra.mxu0 0.0
        %240 = vmatprep.subr.mxu0 0.0
        %241 = vmatpush1.msra.mxu0 0.0
        %242 = vmatprep.subr.mxu0 0.0
        %243 = vmatpush1.msra.mxu0 0.0
        %244 = vmatprep.subr.mxu0 0.0
        %245 = vmatpush1.msra.mxu0 0.0
        %246 = vmatprep.subr.mxu0 0.0
        %247 = vmatpush1.msra.mxu0 0.0
        %248 = vmatprep.subr.mxu0 0.0
        %249 = vmatpush1.msra.mxu0 0.0
        %250 = vmatprep.subr.mxu0 %v208
        %251 = vmatpush1.msra.mxu0 %v207
        %252 = vmatprep.subr.mxu0 0.0
        %253 = vmatpush2.msra.mxu0 0.0
        %254 = vmatprep.subr.mxu0 0.0
        %255 = vmatpush2.msra.mxu0 0.0
        %256 = vmatprep.subr.mxu0 0.0
        %257 = vmatpush2.msra.mxu0 0.0
        %258 = vmatprep.subr.mxu0 0.0
        %259 = vmatpush2.msra.mxu0 0.0
        %260 = vmatprep.subr.mxu0 0.0
        %261 = vmatpush2.msra.mxu0 0.0
        %262 = vmatprep.subr.mxu0 0.0
        %263 = vmatpush2.msra.mxu0 0.0
        %264 = vmatprep.subr.mxu0 0.0
        %265 = vmatpush2.msra.mxu0 0.0
        %266 = vmatprep.subr.mxu0 0.0
        %267 = vmatpush2.msra.mxu0 0.0
        %268 = vmatprep.subr.mxu0 0.0
        %269 = vmatpush2.msra.mxu0 0.0
        %270 = vmatprep.subr.mxu0 0.0
        %271 = vmatpush2.msra.mxu0 0.0
        %272 = vmatprep.subr.mxu0 0.0
        %273 = vmatpush2.msra.mxu0 0.0
        %274 = vmatprep.subr.mxu0 0.0
        %275 = vmatpush2.msra.mxu0 0.0
        %276 = vmatprep.subr.mxu0 0.0
        %277 = vmatpush2.msra.mxu0 0.0
        %278 = vmatprep.subr.mxu0 0.0
        %279 = vmatpush2.msra.mxu0 0.0
        %280 = vmatprep.subr.mxu0 0.0
        %281 = vmatpush2.msra.mxu0 0.0
        %282 = vmatprep.subr.mxu0 0.0
        %283 = vmatpush2.msra.mxu0 0.0
        %284 = vmatprep.mubr.f32.mxu0 0.0
        %285 = vmatmul.mubr.f32.gmra.mxu0 %v218
        %v286 = vpop.f32.mrf.mxu0
        %v287 = vadd.f32 %v214, %v286
        %v288 = vpop.f32.mrf.mxu0
        %v289 = vadd.f32 %v214, %v288
        %290 = vdwg.mxu0
        %v291 = vmul.f32 %v287, 0.01
        %v292 = vmul.f32 %v289, 0.01
        %v293 = vmax.f32 %v287, %v291
        %v294 = vmax.f32 %v289, %v292
        %v297 = vcombine.low %v293, %v294
        %299 = vst [vmem:[%s204] sm:$0xff] %v297
        %s300 = sand.u32 %s112, 1
        %s301 = scalar_lea.sflag [#allocation4], %s300
        %s302 = sand.u32 %s112, 1
        %s303 = smul.addr %s302, 8
        %s304 = scalar_lea.vmem [#allocation5], %s303
        // Predicated region
        $region37: #{tpu_custom_call.1} parent=31 // pred_check
          %p305 = pneg %p122
        $region38: #{tpu_custom_call.1} parent=31 // pred_check_branch
          %307 = sbr.rel (%p305) target = $region40
        $region39: #{tpu_custom_call.1} parent=31 // pred_region
          %s308 = smul.u32 2, %s25
          %s310 = ssub.s32 128, 128
          %311 = vsyncadd %s301, %s310
          %s312 = smul.addr %s24, 2
          %s313 = sadd.s32 %s308, %s312
          %s314 = smul.addr %s313, 64
          %s315 = scalar_lea.hbm %s3, %s314
          %s317 = sshll.u32 %s304, 4
          %s318 = int_to_ptr.vmem [resolvable:$true] %s317
          %320 = dma.vmem_to_hbm [thread:$0]  %s318, 128, %s315, %s301
        $region40: #{tpu_custom_call.1} parent=31 // pred_fallthru
          _
      $region32: #{tpu_custom_call.1} parent=5 // pred_fallthru
        _
      %p321 = scmp.le.s32.totalorder 2, %s15
      // Predicated region
      $region41: #{tpu_custom_call.1} parent=5 // pred_check
        %p322 = pneg %p321
      $region42: #{tpu_custom_call.1} parent=5 // pred_check_branch
        %324 = sbr.rel (%p322) target = $region44
      $region43: #{tpu_custom_call.1} parent=5 // pred_region
        %s325 = ssub.s32 %s15, 2
        // Predicated region
        $region45: #{tpu_custom_call.1} parent=43 // pred_check
          %p326 = pneg %p128
        $region46: #{tpu_custom_call.1} parent=43 // pred_check_branch
          %328 = sbr.rel (%p326) target = $region48
        $region47: #{tpu_custom_call.1} parent=43 // pred_region
          %s329 = sand.u32 %s113, 1
          %s330 = scalar_lea.sflag [#allocation4], %s329
          %s331 = sand.u32 %s113, 1
          %s332 = smul.addr %s331, 8
          %s333 = scalar_lea.vmem [#allocation5], %s332
          %334 = dma.done %s330, 128
        $region48: #{tpu_custom_call.1} parent=43 // pred_fallthru
          _
      $region44: #{tpu_custom_call.1} parent=5 // pred_fallthru
        _
    $region6: #{tpu_custom_call.1} parent=1 // loop_footer
      %s19 = sadd.s32 1, %s15
    $region7: #{tpu_custom_call.1} parent=1 // loop_footer_branch
      %14 = sbr.rel target = $region3
    $region8: #{tpu_custom_call.1} parent=1 // loop_exit
      _
    %335 = vsyncpa [#allocation3], 1
    %s336 = scalar_lea.sflag [#allocation3], 1
    %337 = vsyncpa %s336, 1
    %338 = vsyncpa [#allocation4], 1
    %s339 = scalar_lea.sflag [#allocation4], 1
    %340 = vsyncpa %s339, 1

// kernel: tpu_custom_call.1
$region0: #{tpu_custom_call.1}
  #allocation0 [shape = 'u32[]', space=smem, size = 0x4, offset = 0x4, fixed_abs, tag = 'smem constant byte address 0x4 - core index']
  #allocation1 [shape = 'u32[144,128]{1,0:T(1,128)}', space=vmem, size = 0x12000, scoped, tag = 'internal scratch']
  %s0 = inlined_call_operand.hbm [shape: f32[2,8,256], index: 0, kind: input, shape index: {}]
  %s1 = inlined_call_operand.vmem [shape: f32[4,8], index: 1, kind: input, shape index: {}]
  %s2 = inlined_call_operand.vmem [shape: f32[4,1], index: 2, kind: input, shape index: {}]
  %s3 = inlined_call_operand.hbm [shape: f32[2,4,256], index: 3, kind: output, shape index: {}]
  %s4 = sld [smem:[#allocation0]]
  $region49: #{tpu_custom_call.1} parent=0
    _
  %s6 = ssub.s32 1, %s4
  %s7 = scalar_select 0, %s6, %s4
  $region1: #{tpu_custom_call.1} parent=0
    #allocation2 [shape = 'u8[16384]{0}', space=vmem, size = 0x4000, scoped, tag = 'input window, operand 0']
    #allocation3 [shape = 's32[2]{0}', space=sflag, size = 0x8, scoped, tag = 'scoped memory for tpu_custom_call.1']
    #allocation4 [shape = 's32[2]{0}', space=sflag, size = 0x8, scoped, tag = 'scoped memory for tpu_custom_call.1']
    #allocation5 [shape = 'u8[8192]{0}', space=vmem, size = 0x2000, scoped, tag = 'output window, operand 0']
    %8 = vsyncpa [#allocation3], 0
    %s9 = scalar_lea.sflag [#allocation3], 1
    %10 = vsyncpa %s9, 0
    %11 = vsyncpa [#allocation4], 0
    %s12 = scalar_lea.sflag [#allocation4], 1
    %13 = vsyncpa %s12, 0
    loop: start=0, step=1, limit=4
    $region2: #{tpu_custom_call.1} parent=1 // loop_pre_header
      _
    $region3: #{tpu_custom_call.1} parent=1 // loop_header
      %s15 = sphi 0, %s19
      %p16 = scmp.ge.s32.totalorder %s15, 4
      %s22 = sphi 0, %s34
      %s23 = sphi 0, %s30
      %s24 = sphi 0, %s22
      %s25 = sphi 0, %s23
      %s26 = sphi 0, %s24
      %s27 = sphi 0, %s25
      %s39 = sphi 0, %s41
      %s42 = sphi 0, %s39
      %s43 = sphi 0, %s42
      %s59 = sphi 0, %s43
      %s63 = sphi 0, %s63
      %s65 = sphi 0, %s63
      %s66 = sphi 0, %s65
      %s80 = sphi 0, %s66
      %s84 = sphi 0, %s84
      %s86 = sphi 0, %s84
      %s87 = sphi 0, %s86
      %s101 = sphi 0, %s87
      %s109 = sphi 0, %s111
      %s112 = sphi 0, %s109
      %s113 = sphi 0, %s112
      %s129 = sphi 0, %s113
    $region4: #{tpu_custom_call.1} parent=1 // loop_header_branch
      %18 = sbr.rel (%p16) target = $region8
    $region5: #{tpu_custom_call.1} parent=1 // loop_body
      %s20 = ssub.s32 %s15, 1
      %s21 = ssub.s32 %s15, 2
      %s28 = sadd.s32 1, %s23
      %p29 = scmp.ge.s32.totalorder %s28, 1
      %s30 = scalar_select %p29, 0, %s28
      %s31 = sadd.s32 1, %s22
      %s32 = scalar_select %p29, %s31, %s22
      %p33 = scmp.ge.s32.totalorder %s32, 2
      %s34 = scalar_select %p33, 0, %s32
      %s35 = ssub.s32 %s22, %s34
      %s36 = ssub.s32 %s23, %s30
      %s37 = sor.u32 %s35, %s36
      %p38 = scmp.eq.s32.totalorder %s37, 0
      %s40 = sadd.s32 %s39, 1
      %s41 = scalar_select %p38, %s39, %s40
      %p44 = pneg %p38
      %p45 = scmp.eq.s32.totalorder %s15, 1
      %p46 = por %p44, %p45
      %p47 = scmp.ne.s32.totalorder %s39, %s42
      %p48 = scmp.eq.s32.totalorder %s15, 0
      %p49 = por %p47, %p48
      %p50 = scmp.ne.s32.totalorder %s39, %s42
      %p51 = scmp.eq.s32.totalorder %s20, 1
      %p52 = por %p50, %p51
      %p53 = scmp.ne.s32.totalorder %s42, %s43
      %p54 = scmp.eq.s32.totalorder %s20, 0
      %p55 = por %p53, %p54
      %p56 = scmp.ne.s32.totalorder %s42, %s43
      %p57 = scmp.eq.s32.totalorder %s21, 1
      %p58 = por %p56, %p57
      %p60 = scmp.ne.s32.totalorder %s43, %s59
      %p61 = scmp.eq.s32.totalorder %s21, 0
      %p62 = por %p60, %p61
      %s64 = sadd.s32 %s63, 1
      %p67 = scmp.eq.s32.totalorder %s15, 1
      %p68 = scmp.ne.s32.totalorder %s63, %s65
      %p69 = scmp.eq.s32.totalorder %s15, 0
      %p70 = por %p68, %p69
      %p71 = scmp.ne.s32.totalorder %s63, %s65
      %p72 = scmp.eq.s32.totalorder %s20, 1
      %p73 = por %p71, %p72
      %p74 = scmp.ne.s32.totalorder %s65, %s66
      %p75 = scmp.eq.s32.totalorder %s20, 0
      %p76 = por %p74, %p75
      %p77 = scmp.ne.s32.totalorder %s65, %s66
      %p78 = scmp.eq.s32.totalorder %s21, 1
      %p79 = por %p77, %p78
      %p81 = scmp.ne.s32.totalorder %s66, %s80
      %p82 = scmp.eq.s32.totalorder %s21, 0
      %p83 = por %p81, %p82
      %s85 = sadd.s32 %s84, 1
      %p88 = scmp.eq.s32.totalorder %s15, 1
      %p89 = scmp.ne.s32.totalorder %s84, %s86
      %p90 = scmp.eq.s32.totalorder %s15, 0
      %p91 = por %p89, %p90
      %p92 = scmp.ne.s32.totalorder %s84, %s86
      %p93 = scmp.eq.s32.totalorder %s20, 1
      %p94 = por %p92, %p93
      %p95 = scmp.ne.s32.totalorder %s86, %s87
      %p96 = scmp.eq.s32.totalorder %s20, 0
      %p97 = por %p95, %p96
      %p98 = scmp.ne.s32.totalorder %s86, %s87
      %p99 = scmp.eq.s32.totalorder %s21, 1
      %p100 = por %p98, %p99
      %p102 = scmp.ne.s32.totalorder %s87, %s101
      %p103 = scmp.eq.s32.totalorder %s21, 0
      %p104 = por %p102, %p103
      %s105 = ssub.s32 %s22, %s34
      %s106 = ssub.s32 %s23, %s30
      %s107 = sor.u32 %s105, %s106
      %p108 = scmp.eq.s32.totalorder %s107, 0
      %s110 = sadd.s32 %s109, 1
      %s111 = scalar_select %p108, %s109, %s110
      %p114 = pneg %p108
      %p115 = scmp.eq.s32.totalorder %s15, 1
      %p116 = por %p114, %p115
      %p117 = scmp.ne.s32.totalorder %s109, %s112
      %p118 = scmp.eq.s32.totalorder %s15, 0
      %p119 = por %p117, %p118
      %p120 = scmp.ne.s32.totalorder %s109, %s112
      %p121 = scmp.eq.s32.totalorder %s20, 1
      %p122 = por %p120, %p121
      %p123 = scmp.ne.s32.totalorder %s112, %s113
      %p124 = scmp.eq.s32.totalorder %s20, 0
      %p125 = por %p123, %p124
      %p126 = scmp.ne.s32.totalorder %s112, %s113
      %p127 = scmp.eq.s32.totalorder %s21, 1
      %p128 = por %p126, %p127
      %p130 = scmp.ne.s32.totalorder %s113, %s129
      %p131 = scmp.eq.s32.totalorder %s21, 0
      %p132 = por %p130, %p131
      %p133 = scmp.le.s32.totalorder 1, %s15
      %p134 = scmp.lt.s32.totalorder %s15, 3
      %p135 = pnand %p133, %p134
      %p136 = pneg %p135
      // Predicated region
      $region9: #{tpu_custom_call.1} parent=5 // pred_check
        _
      $region10: #{tpu_custom_call.1} parent=5 // pred_check_branch
        %138 = sbr.rel (%p135) target = $region12
      $region11: #{tpu_custom_call.1} parent=5 // pred_region
        %s139 = ssub.s32 %s15, 1
        // Predicated region
        $region13: #{tpu_custom_call.1} parent=11 // pred_check
          %p140 = pneg %p76
        $region14: #{tpu_custom_call.1} parent=11 // pred_check_branch
          %142 = sbr.rel (%p140) target = $region16
        $region15: #{tpu_custom_call.1} parent=11 // pred_region
          _
        $region16: #{tpu_custom_call.1} parent=11 // pred_fallthru
          _
        // Predicated region
        $region17: #{tpu_custom_call.1} parent=11 // pred_check
          %p143 = pneg %p97
        $region18: #{tpu_custom_call.1} parent=11 // pred_check_branch
          %145 = sbr.rel (%p143) target = $region20
        $region19: #{tpu_custom_call.1} parent=11 // pred_region
          _
        $region20: #{tpu_custom_call.1} parent=11 // pred_fallthru
          _
      $region12: #{tpu_custom_call.1} parent=5 // pred_fallthru
        _
      %p146 = scmp.lt.s32.totalorder %s15, 2
      // Predicated region
      $region21: #{tpu_custom_call.1} parent=5 // pred_check
        %p147 = pneg %p146
      $region22: #{tpu_custom_call.1} parent=5 // pred_check_branch
        %149 = sbr.rel (%p147) target = $region24
      $region23: #{tpu_custom_call.1} parent=5 // pred_region
        // Predicated region
        $region25: #{tpu_custom_call.1} parent=23 // pred_check
          %p150 = pneg %p49
        $region26: #{tpu_custom_call.1} parent=23 // pred_check_branch
          %152 = sbr.rel (%p150) target = $region28
        $region27: #{tpu_custom_call.1} parent=23 // pred_region
          %s153 = sand.u32 %s39, 1
          %s154 = scalar_lea.sflag [#allocation3], %s153
          %s155 = sand.u32 %s39, 1
          %s156 = smul.addr %s155, 16
          %s157 = scalar_lea.vmem [#allocation2], %s156
          %s158 = smul.u32 2, %s23
          %s160 = ssub.s32 256, 256
          %161 = vsyncadd %s154, %s160
          %s162 = smul.addr %s22, 2
          %s163 = sadd.s32 %s158, %s162
          %s164 = smul.addr %s163, 128
          %s165 = scalar_lea.hbm %s0, %s164
          %s167 = sshll.u32 %s157, 4
          %s168 = int_to_ptr.vmem [resolvable:$true] %s167
          %170 = dma.hbm_to_vmem [thread:$0]  %s165, 256, %s168, %s154
        $region28: #{tpu_custom_call.1} parent=23 // pred_fallthru
          _
      $region24: #{tpu_custom_call.1} parent=5 // pred_fallthru
        _
      %p171 = scmp.le.s32.totalorder 1, %s15
      %p172 = scmp.lt.s32.totalorder %s15, 3
      %p173 = pnand %p171, %p172
      %p174 = pneg %p173
      // Predicated region
      $region29: #{tpu_custom_call.1} parent=5 // pred_check
        _
      $region30: #{tpu_custom_call.1} parent=5 // pred_check_branch
        %176 = sbr.rel (%p173) target = $region32
      $region31: #{tpu_custom_call.1} parent=5 // pred_region
        %s177 = ssub.s32 %s15, 1
        %s178 = sand.u32 %s42, 1
        %s179 = scalar_lea.sflag [#allocation3], %s178
        %s180 = sand.u32 %s42, 1
        %s181 = smul.addr %s180, 16
        %s182 = scalar_lea.vmem [#allocation2], %s181
        // Predicated region
        $region33: #{tpu_custom_call.1} parent=31 // pred_check
          %p183 = pneg %p55
        $region34: #{tpu_custom_call.1} parent=31 // pred_check_branch
          %185 = sbr.rel (%p183) target = $region36
        $region35: #{tpu_custom_call.1} parent=31 // pred_region
          %186 = dma.done %s179, 256
        $region36: #{tpu_custom_call.1} parent=31 // pred_fallthru
          _
        %s187 = sand.u32 %s42, 1
        %s188 = scalar_lea.sflag [#allocation3], %s187
        %s189 = sand.u32 %s42, 1
        %s190 = smul.addr %s189, 16
        %s191 = scalar_lea.vmem [#allocation2], %s190
        %p192 = pneg %p55
        %p193 = pneg %p52
        %p194 = pneg %p76
        %p195 = pneg %p73
        %p196 = pneg %p97
        %p197 = pneg %p94
        %p198 = pneg %p125
        %p199 = pneg %p122
        %s200 = sand.u32 %s112, 1
        %s201 = scalar_lea.sflag [#allocation4], %s200
        %s202 = sand.u32 %s112, 1
        %s203 = smul.addr %s202, 8
        %s204 = scalar_lea.vmem [#allocation5], %s203
        %s205 = smul.u32 2, %s25
        %s206 = smul.u32 2, %s25
        %v207 = vld [vmem:[%s182] sm:$0xff]
        %v208 = vld [vmem:[%s182 + $0x8] sm:$0xff]
        %v209 = vld [vmem:[%s1] sm:$0xf]
        %v210 = vld [vmem:[%s2] sm:$0xf]
        %212 = vset.pattern.permute.xlu0 0
        %213 = vperm.xlu0 %212, %v210
        %v214 = vpop.permute.xlu0 %213
        %vm216 = vcmask 64512
        %v218 = vsel %vm216, %v209, 0
        %220 = vmatprep.subr.mxu0 0.0
        %221 = vmatpush1.msra.mxu0 0.0
        %222 = vmatprep.subr.mxu0 0.0
        %223 = vmatpush1.msra.mxu0 0.0
        %224 = vmatprep.subr.mxu0 0.0
        %225 = vmatpush1.msra.mxu0 0.0
        %226 = vmatprep.subr.mxu0 0.0
        %227 = vmatpush1.msra.mxu0 0.0
        %228 = vmatprep.subr.mxu0 0.0
        %229 = vmatpush1.msra.mxu0 0.0
        %230 = vmatprep.subr.mxu0 0.0
        %231 = vmatpush1.msra.mxu0 0.0
        %232 = vmatprep.subr.mxu0 0.0
        %233 = vmatpush1.msra.mxu0 0.0
        %234 = vmatprep.subr.mxu0 0.0
        %235 = vmatpush1.msra.mxu0 0.0
        %236 = vmatprep.subr.mxu0 0.0
        %237 = vmatpush1.msra.mxu0 0.0
        %238 = vmatprep.subr.mxu0 0.0
        %239 = vmatpush1.msra.mxu0 0.0
        %240 = vmatprep.subr.mxu0 0.0
        %241 = vmatpush1.msra.mxu0 0.0
        %242 = vmatprep.subr.mxu0 0.0
        %243 = vmatpush1.msra.mxu0 0.0
        %244 = vmatprep.subr.mxu0 0.0
        %245 = vmatpush1.msra.mxu0 0.0
        %246 = vmatprep.subr.mxu0 0.0
        %247 = vmatpush1.msra.mxu0 0.0
        %248 = vmatprep.subr.mxu0 0.0
        %249 = vmatpush1.msra.mxu0 0.0
        %250 = vmatprep.subr.mxu0 %v208
        %251 = vmatpush1.msra.mxu0 %v207
        %252 = vmatprep.subr.mxu0 0.0
        %253 = vmatpush2.msra.mxu0 0.0
        %254 = vmatprep.subr.mxu0 0.0
        %255 = vmatpush2.msra.mxu0 0.0
        %256 = vmatprep.subr.mxu0 0.0
        %257 = vmatpush2.msra.mxu0 0.0
        %258 = vmatprep.subr.mxu0 0.0
        %259 = vmatpush2.msra.mxu0 0.0
        %260 = vmatprep.subr.mxu0 0.0
        %261 = vmatpush2.msra.mxu0 0.0
        %262 = vmatprep.subr.mxu0 0.0
        %263 = vmatpush2.msra.mxu0 0.0
        %264 = vmatprep.subr.mxu0 0.0
        %265 = vmatpush2.msra.mxu0 0.0
        %266 = vmatprep.subr.mxu0 0.0
        %267 = vmatpush2.msra.mxu0 0.0
        %268 = vmatprep.subr.mxu0 0.0
        %269 = vmatpush2.msra.mxu0 0.0
        %270 = vmatprep.subr.mxu0 0.0
        %271 = vmatpush2.msra.mxu0 0.0
        %272 = vmatprep.subr.mxu0 0.0
        %273 = vmatpush2.msra.mxu0 0.0
        %274 = vmatprep.subr.mxu0 0.0
        %275 = vmatpush2.msra.mxu0 0.0
        %276 = vmatprep.subr.mxu0 0.0
        %277 = vmatpush2.msra.mxu0 0.0
        %278 = vmatprep.subr.mxu0 0.0
        %279 = vmatpush2.msra.mxu0 0.0
        %280 = vmatprep.subr.mxu0 0.0
        %281 = vmatpush2.msra.mxu0 0.0
        %282 = vmatprep.subr.mxu0 0.0
        %283 = vmatpush2.msra.mxu0 0.0
        %284 = vmatprep.mubr.f32.mxu0 0.0
        %285 = vmatmul.mubr.f32.gmra.mxu0 %v218
        %v286 = vpop.f32.mrf.mxu0
        %v287 = vadd.f32 %v214, %v286
        %v288 = vpop.f32.mrf.mxu0
        %v289 = vadd.f32 %v214, %v288
        %290 = vdwg.mxu0
        %v291 = vmul.f32 %v287, 0.01
        %v292 = vmul.f32 %v289, 0.01
        %v293 = vmax.f32 %v287, %v291
        %v294 = vmax.f32 %v289, %v292
        %v297 = vcombine.low %v293, %v294
        %299 = vst [vmem:[%s204] sm:$0xff] %v297
        %s300 = sand.u32 %s112, 1
        %s301 = scalar_lea.sflag [#allocation4], %s300
        %s302 = sand.u32 %s112, 1
        %s303 = smul.addr %s302, 8
        %s304 = scalar_lea.vmem [#allocation5], %s303
        // Predicated region
        $region37: #{tpu_custom_call.1} parent=31 // pred_check
          %p305 = pneg %p122
        $region38: #{tpu_custom_call.1} parent=31 // pred_check_branch
          %307 = sbr.rel (%p305) target = $region40
        $region39: #{tpu_custom_call.1} parent=31 // pred_region
          %s308 = smul.u32 2, %s25
          %s310 = ssub.s32 128, 128
          %311 = vsyncadd %s301, %s310
          %s312 = smul.addr %s24, 2
          %s313 = sadd.s32 %s308, %s312
          %s314 = smul.addr %s313, 64
          %s315 = scalar_lea.hbm %s3, %s314
          %s317 = sshll.u32 %s304, 4
          %s318 = int_to_ptr.vmem [resolvable:$true] %s317
          %320 = dma.vmem_to_hbm [thread:$0]  %s318, 128, %s315, %s301
        $region40: #{tpu_custom_call.1} parent=31 // pred_fallthru
          _
      $region32: #{tpu_custom_call.1} parent=5 // pred_fallthru
        _
      %p321 = scmp.le.s32.totalorder 2, %s15
      // Predicated region
      $region41: #{tpu_custom_call.1} parent=5 // pred_check
        %p322 = pneg %p321
      $region42: #{tpu_custom_call.1} parent=5 // pred_check_branch
        %324 = sbr.rel (%p322) target = $region44
      $region43: #{tpu_custom_call.1} parent=5 // pred_region
        %s325 = ssub.s32 %s15, 2
        // Predicated region
        $region45: #{tpu_custom_call.1} parent=43 // pred_check
          %p326 = pneg %p128
        $region46: #{tpu_custom_call.1} parent=43 // pred_check_branch
          %328 = sbr.rel (%p326) target = $region48
        $region47: #{tpu_custom_call.1} parent=43 // pred_region
          %s329 = sand.u32 %s113, 1
          %s330 = scalar_lea.sflag [#allocation4], %s329
          %s331 = sand.u32 %s113, 1
          %s332 = smul.addr %s331, 8
          %s333 = scalar_lea.vmem [#allocation5], %s332
          %334 = dma.done %s330, 128
        $region48: #{tpu_custom_call.1} parent=43 // pred_fallthru
          _
      $region44: #{tpu_custom_call.1} parent=5 // pred_fallthru
        _
    $region6: #{tpu_custom_call.1} parent=1 // loop_footer
      %s19 = sadd.s32 1, %s15
    $region7: #{tpu_custom_call.1} parent=1 // loop_footer_branch
      %14 = sbr.rel target = $region3
    $region8: #{tpu_custom_call.1} parent=1 // loop_exit
      _
    %335 = vsyncpa [#allocation3], 1
    %s336 = scalar_lea.sflag [#allocation3], 1
    %337 = vsyncpa %s336, 1
    %338 = vsyncpa [#allocation4], 1
    %s339 = scalar_lea.sflag [#allocation4], 1
    %340 = vsyncpa %s339, 1

</llo_original>
